<compile_context>
chip_gen: v6e
topology: v6e:2x2x1
jax: 0.10.0
libtpu: 0.0.40
codegen_flags: <defaults>
</compile_context>

<pallas_src>
import jax
import jax.numpy as jnp
from jax import lax
from jax.experimental import pallas as pl
from jax.experimental.pallas import tpu as pltpu


# ----------------------------- Pallas kernels -------------------------------

def _convrnn_first_kernel(px_ref, wx_ref, b_ref, o_ref):
    """o = leaky_relu(tanh(wx @ px + b), 0.2) for one (batch, spatial) tile.

    px_ref: (1, Kx, tHW)   im2col(x)^T tile, bf16
    wx_ref: (Cout, Kx)     transposed conv_x weight, bf16
    b_ref:  (Cout, 1)      f32 bias
    o_ref:  (1, Cout, tHW) f32 output tile (lane-dense: tHW % 128 == 0)
    """
    acc = jnp.dot(wx_ref[...], px_ref[0], preferred_element_type=jnp.float32)
    t = jnp.tanh(acc + b_ref[...])
    o_ref[0] = jnp.maximum(t, 0.2 * t).astype(o_ref.dtype)


def _convrnn_recurrent_kernel(px_ref, ph_ref, wx_ref, wh_ref, b_ref, o_ref):
    """o = leaky_relu(tanh(wx @ px + wh @ ph + b), 0.2) for one tile."""
    acc = jnp.dot(wx_ref[...], px_ref[0], preferred_element_type=jnp.float32)
    acc = acc + jnp.dot(wh_ref[...], ph_ref[0],
                        preferred_element_type=jnp.float32)
    t = jnp.tanh(acc + b_ref[...])
    o_ref[0] = jnp.maximum(t, 0.2 * t).astype(o_ref.dtype)


# ------------------------------ JAX glue ------------------------------------

def _im2col_t(x_nchw, kernel, dilation):
    """Transposed im2col: (N,C,H,W) -> (N, K*K*C, H*W), rows ordered (ky,kx,c)."""
    N, C, H, W = x_nchw.shape
    pad = dilation * (kernel - 1) // 2
    xp = jnp.pad(x_nchw, ((0, 0), (0, 0), (pad, pad), (pad, pad)))
    cols = []
    for ky in range(kernel):
        for kx in range(kernel):
            cols.append(xp[:, :, ky * dilation:ky * dilation + H,
                           kx * dilation:kx * dilation + W])
    return jnp.stack(cols, axis=1).reshape(N, kernel * kernel * C, H * W)


def _pick_hw_tile(hw, bytes_per_col, n_batch):
    """Largest multiple-of-128 divisor of hw fitting a VMEM byte budget."""
    budget = 6 * 1024 * 1024                       # double-buffered working set
    cap = (budget // max(2 * bytes_per_col, 1)) // 128 * 128
    cap = max(128, min(cap, 8192))
    best = 0
    t = 128
    while t <= min(hw, cap):
        if hw % t == 0:
            best = t
        t += 128
    if best == 0:
        return hw                                  # full row block (allowed: full dim)
    # keep >= 2 total grid steps when possible (pipelining / megacore split)
    while (n_batch * (hw // best) < 2 and best > 128
           and hw % (best // 2) == 0 and (best // 2) % 128 == 0):
        best //= 2
    return best


_COMPILER_PARAMS = pltpu.CompilerParams(
    dimension_semantics=("parallel", "parallel"),
    vmem_limit_bytes=32 * 1024 * 1024,
)


class ConvRNNPallas:
    """Pallas implementation of the PyTorch ConvRNN module (forward only)."""

    def __init__(self, inp_dim, oup_dim, kernel, dilation, key,
                 compute_dtype=jnp.bfloat16):
        self.inp_dim = inp_dim
        self.oup_dim = oup_dim
        self.kernel = kernel
        self.dilation = dilation
        self.compute_dtype = compute_dtype

        k1, k2, k3, k4 = jax.random.split(key, 4)
        # PyTorch conv weight layout: (Cout, Cin, K, K).  Deterministic init.
        wx = jax.random.normal(k1, (oup_dim, inp_dim, kernel, kernel), jnp.float32) * 0.1
        wh = jax.random.normal(k2, (oup_dim, oup_dim, kernel, kernel), jnp.float32) * 0.1
        bx = jax.random.normal(k3, (oup_dim,), jnp.float32) * 0.1
        bh = jax.random.normal(k4, (oup_dim,), jnp.float32) * 0.1
        self.wx_oihw, self.wh_oihw, self.bx, self.bh = wx, wh, bx, bh

        self.kk_in = kernel * kernel * inp_dim
        self.kk_out = kernel * kernel * oup_dim

        # Transposed matmul weights: rows = Cout, cols ordered (ky, kx, cin)
        # to match the row ordering produced by _im2col_t.  No K padding in
        # HBM -- Mosaic pads the full-extent K dim internally in VMEM.
        self.w_x = jnp.transpose(wx, (0, 2, 3, 1)).reshape(
            oup_dim, self.kk_in).astype(compute_dtype)
        self.w_h = jnp.transpose(wh, (0, 2, 3, 1)).reshape(
            oup_dim, self.kk_out).astype(compute_dtype)
        self.b_x = bx.reshape(oup_dim, 1)            # f32 bias columns
        self.b_xh = (bx + bh).reshape(oup_dim, 1)

        # Jit the whole forward (im2col + pallas) so patch extraction fuses.
        self._fwd_first = jax.jit(self._forward_first)
        self._fwd_rec = jax.jit(self._forward_recurrent)

    # -- first step: h is None ------------------------------------------------
    def _forward_first(self, x):
        N, _, H, W = x.shape
        Cout, HW = self.oup_dim, H * W
        px = _im2col_t(x.astype(self.compute_dtype), self.kernel, self.dilation)
        Kx = px.shape[1]
        thw = _pick_hw_tile(HW, 2 * Kx + 4 * Cout, N)
        grid = (N, HW // thw)

        out = pl.pallas_call(
            _convrnn_first_kernel,
            out_shape=jax.ShapeDtypeStruct((N, Cout, HW), jnp.float32),
            grid=grid,
            in_specs=[
                pl.BlockSpec((1, Kx, thw), lambda n, m: (n, 0, m)),
                pl.BlockSpec((Cout, Kx), lambda n, m: (0, 0)),
                pl.BlockSpec((Cout, 1), lambda n, m: (0, 0)),
            ],
            out_specs=pl.BlockSpec((1, Cout, thw), lambda n, m: (n, 0, m)),
            compiler_params=_COMPILER_PARAMS,
        )(px, self.w_x, self.b_x)
        # (N, Cout, H*W) is already NCHW once reshaped -- no transpose needed.
        return out.reshape(N, Cout, H, W)

    # -- recurrent step --------------------------------------------------------
    def _forward_recurrent(self, x, h):
        N, _, H, W = x.shape
        Cout, HW = self.oup_dim, H * W
        cd = self.compute_dtype
        px = _im2col_t(x.astype(cd), self.kernel, self.dilation)
        ph = _im2col_t(h.astype(cd), self.kernel, 1)
        Kx, Kh = px.shape[1], ph.shape[1]
        thw = _pick_hw_tile(HW, 2 * (Kx + Kh) + 4 * Cout, N)
        grid = (N, HW // thw)

        out = pl.pallas_call(
            _convrnn_recurrent_kernel,
            out_shape=jax.ShapeDtypeStruct((N, Cout, HW), jnp.float32),
            grid=grid,
            in_specs=[
                pl.BlockSpec((1, Kx, thw), lambda n, m: (n, 0, m)),
                pl.BlockSpec((1, Kh, thw), lambda n, m: (n, 0, m)),
                pl.BlockSpec((Cout, Kx), lambda n, m: (0, 0)),
                pl.BlockSpec((Cout, Kh), lambda n, m: (0, 0)),
                pl.BlockSpec((Cout, 1), lambda n, m: (0, 0)),
            ],
            out_specs=pl.BlockSpec((1, Cout, thw), lambda n, m: (n, 0, m)),
            compiler_params=_COMPILER_PARAMS,
        )(px, ph, self.w_x, self.w_h, self.b_xh)
        return out.reshape(N, Cout, H, W)

    def __call__(self, x_nchw, h_nchw=None):
        if h_nchw is None:
            h_out = self._fwd_first(x_nchw)
        else:
            h_out = self._fwd_rec(x_nchw, h_nchw)
        return h_out, h_out


# ------------------------- pure-JAX reference check -------------------------

def _ref_forward(mod, x, h=None):
    pad_x = mod.dilation * (mod.kernel - 1) // 2
    pad_h = (mod.kernel - 1) // 2
    cx = lax.conv_general_dilated(
        x, mod.wx_oihw, window_strides=(1, 1),
        padding=[(pad_x, pad_x), (pad_x, pad_x)],
        rhs_dilation=(mod.dilation, mod.dilation),
        dimension_numbers=("NCHW", "OIHW", "NCHW"),
    ) + mod.bx[None, :, None, None]
    if h is None:
        t = jnp.tanh(cx)
    else:
        ch = lax.conv_general_dilated(
            h, mod.wh_oihw, window_strides=(1, 1),
            padding=[(pad_h, pad_h), (pad_h, pad_h)],
            dimension_numbers=("NCHW", "OIHW", "NCHW"),
        ) + mod.bh[None, :, None, None]
        t = jnp.tanh(cx + ch)
    out = jnp.where(t >= 0, t, 0.2 * t)
    return out, out


if __name__ == "__main__":
    key = jax.random.PRNGKey(0)
    kp, kx = jax.random.split(key)

    N, Cin, Cout, H, W = 2, 4, 8, 16, 16
    kernel, dilation = 3, 2

    mod = ConvRNNPallas(Cin, Cout, kernel, dilation, kp)
    x = jax.random.normal(kx, (N, Cin, H, W), jnp.float32)

    # First step: h is None.
    h1, _ = mod(x, None)
    h1 = jax.block_until_ready(h1)
    # Second step: recurrent path with the previous hidden state.
    h2, _ = mod(x, h1)
    h2 = jax.block_until_ready(h2)

    # Sanity check against a pure-JAX (f32) reference of the PyTorch semantics.
    r1, _ = _ref_forward(mod, x, None)
    r2, _ = _ref_forward(mod, x, r1)
    err1 = float(jnp.max(jnp.abs(h1 - r1)))
    err2 = float(jnp.max(jnp.abs(h2 - r2)))
    # bf16 patches/weights with f32 accumulation: outputs are tanh-bounded, so
    # a ~1e-2 absolute deviation is expected; 5e-2 still catches structural bugs.
    assert err1 < 5e-2 and err2 < 5e-2, (err1, err2)

    print("KERNEL_OK")
</pallas_src>

<mosaic_0001>
module attributes {stable_mosaic.version = 11 : i64} {
  func.func @_convrnn_first_kernel(%arg0: i32, %arg1: i32, %arg2: memref<1x36x256xbf16, #tpu.memory_space<vmem>>, %arg3: memref<8x36xbf16, #tpu.memory_space<vmem>>, %arg4: memref<8x1xf32, #tpu.memory_space<vmem>>, %arg5: memref<1x8x256xf32, #tpu.memory_space<vmem>>) attributes {dimension_semantics = [#tpu.dimension_semantics<parallel>, #tpu.dimension_semantics<parallel>], iteration_bounds = array<i64: 2, 1>, scalar_prefetch = 0 : i64, scratch_operands = 0 : i64, tpu.core_type = #tpu.core_type<tc>, window_params = [{transform_indices = @transform_0, window_bounds = array<i64: 1, 36, 256>}, {pipeline_mode = #tpu.pipeline_mode<synchronous>, transform_indices = @transform_1, window_bounds = array<i64: 8, 36>}, {pipeline_mode = #tpu.pipeline_mode<synchronous>, transform_indices = @transform_2, window_bounds = array<i64: 8, 1>}, {transform_indices = @transform_3, window_bounds = array<i64: 1, 8, 256>}]} {
    %c0 = arith.constant 0 : index
    %c0_0 = arith.constant 0 : index
    %0 = vector.load %arg3[%c0, %c0_0] : memref<8x36xbf16, #tpu.memory_space<vmem>>, vector<8x36xbf16>
    %c0_1 = arith.constant 0 : index
    %c0_2 = arith.constant 0 : index
    %c0_3 = arith.constant 0 : index
    %1 = vector.load %arg2[%c0_1, %c0_2, %c0_3] : memref<1x36x256xbf16, #tpu.memory_space<vmem>>, vector<1x36x256xbf16>
    %2 = vector.shape_cast %1 : vector<1x36x256xbf16> to vector<36x256xbf16>
    %cst = arith.constant dense<0.000000e+00> : vector<8x256xf32>
    %3 = tpu.matmul %0, %2, %cst {dimension_numbers = #tpu.dot_dimension_numbers<[1], [0], [0], [1], [0, 0, 1, 1], [], []>} : vector<8x36xbf16>, vector<36x256xbf16>, vector<8x256xf32> -> vector<8x256xf32>
    %c0_4 = arith.constant 0 : index
    %c0_5 = arith.constant 0 : index
    %4 = vector.load %arg4[%c0_4, %c0_5] : memref<8x1xf32, #tpu.memory_space<vmem>>, vector<8x1xf32>
    %5 = vector.broadcast %4 : vector<8x1xf32> to vector<8x256xf32>
    %6 = arith.addf %3, %5 : vector<8x256xf32>
    %7 = math.tanh %6 : vector<8x256xf32>
    %cst_6 = arith.constant 2.000000e-01 : f32
    %8 = vector.broadcast %cst_6 : f32 to vector<8x256xf32>
    %9 = arith.mulf %8, %7 : vector<8x256xf32>
    %10 = arith.maximumf %7, %9 : vector<8x256xf32>
    %c0_7 = arith.constant 0 : index
    %c0_8 = arith.constant 0 : index
    %c0_9 = arith.constant 0 : index
    %11 = vector.load %arg5[%c0_7, %c0_8, %c0_9] : memref<1x8x256xf32, #tpu.memory_space<vmem>>, vector<1x8x256xf32>
    %12 = vector.shape_cast %11 : vector<1x8x256xf32> to vector<8x256xf32>
    %13 = vector.shape_cast %10 : vector<8x256xf32> to vector<1x8x256xf32>
    tpu.vector_store %arg5[%c0_7, %c0_8, %c0_9], %13 {strides = array<i32>} : memref<1x8x256xf32, #tpu.memory_space<vmem>>, vector<1x8x256xf32>,
    return
  }
  func.func @transform_0(%arg0: i32, %arg1: i32) -> (i32, i32, i32) {
    %c0_i32 = arith.constant 0 : i32
    %c0_i32_0 = arith.constant 0 : i32
    return %arg0, %c0_i32, %arg1 : i32, i32, i32
  }
  func.func @transform_1(%arg0: i32, %arg1: i32) -> (i32, i32) {
    %c0_i32 = arith.constant 0 : i32
    %c0_i32_0 = arith.constant 0 : i32
    %c0_i32_1 = arith.constant 0 : i32
    return %c0_i32, %c0_i32_0 : i32, i32
  }
  func.func @transform_2(%arg0: i32, %arg1: i32) -> (i32, i32) {
    %c0_i32 = arith.constant 0 : i32
    %c0_i32_0 = arith.constant 0 : i32
    %c0_i32_1 = arith.constant 0 : i32
    return %c0_i32, %c0_i32_0 : i32, i32
  }
  func.func @transform_3(%arg0: i32, %arg1: i32) -> (i32, i32, i32) {
    %c0_i32 = arith.constant 0 : i32
    %c0_i32_0 = arith.constant 0 : i32
    return %arg0, %c0_i32, %arg1 : i32, i32, i32
  }
}

</mosaic_0001>

<llo_original>
// kernel: _forward_first.1
$region0: #{_forward_first.1}
  #allocation0 [shape = 'u32[]', space=smem, size = 0x4, offset = 0x4, fixed_abs, tag = 'smem constant byte address 0x4 - core index']
  #allocation1 [shape = 'u32[144,128]{1,0:T(1,128)}', space=vmem, size = 0x12000, scoped, tag = 'internal scratch']
  %s0 = inlined_call_operand.vmem [shape: bf16[2,36,256], index: 0, kind: input, shape index: {}]
  %s1 = inlined_call_operand.vmem [shape: bf16[8,36], index: 1, kind: input, shape index: {}]
  %s2 = inlined_call_operand.vmem [shape: f32[8,1], index: 2, kind: input, shape index: {}]
  %s3 = inlined_call_operand.vmem [shape: f32[2,8,256], index: 3, kind: output, shape index: {}]
  %s4 = sld [smem:[#allocation0]]
  $region45: #{_forward_first.1} parent=0
    _
  %s6 = ssub.s32 1, %s4
  %s7 = scalar_select 0, %s6, %s4
  loop: start=0, step=1, limit=4
  $region2: #{_forward_first.1} parent=0 // loop_pre_header
    _
  $region3: #{_forward_first.1} parent=0 // loop_header
    %s9 = sphi 0, %s13
    %p10 = scmp.ge.s32.totalorder %s9, 4
    %s16 = sphi 0, %s28
    %s17 = sphi 0, %s24
    %s18 = sphi 0, %s16
    %s19 = sphi 0, %s17
    %s20 = sphi 0, %s18
    %s21 = sphi 0, %s19
    %s33 = sphi 0, %s35
    %s36 = sphi 0, %s33
    %s37 = sphi 0, %s36
    %s53 = sphi 0, %s37
    %s57 = sphi 0, %s57
    %s59 = sphi 0, %s57
    %s60 = sphi 0, %s59
    %s74 = sphi 0, %s60
    %s78 = sphi 0, %s78
    %s80 = sphi 0, %s78
    %s81 = sphi 0, %s80
    %s95 = sphi 0, %s81
    %s103 = sphi 0, %s105
    %s106 = sphi 0, %s103
    %s107 = sphi 0, %s106
    %s123 = sphi 0, %s107
  $region4: #{_forward_first.1} parent=0 // loop_header_branch
    %12 = sbr.rel (%p10) target = $region8
  $region5: #{_forward_first.1} parent=0 // loop_body
    %s14 = ssub.s32 %s9, 1
    %s15 = ssub.s32 %s9, 2
    %s22 = sadd.s32 1, %s17
    %p23 = scmp.ge.s32.totalorder %s22, 1
    %s24 = scalar_select %p23, 0, %s22
    %s25 = sadd.s32 1, %s16
    %s26 = scalar_select %p23, %s25, %s16
    %p27 = scmp.ge.s32.totalorder %s26, 2
    %s28 = scalar_select %p27, 0, %s26
    %s29 = ssub.s32 %s16, %s28
    %s30 = ssub.s32 %s17, %s24
    %s31 = sor.u32 %s29, %s30
    %p32 = scmp.eq.s32.totalorder %s31, 0
    %s34 = sadd.s32 %s33, 1
    %s35 = scalar_select %p32, %s33, %s34
    %p38 = pneg %p32
    %p39 = scmp.eq.s32.totalorder %s9, 1
    %p40 = por %p38, %p39
    %p41 = scmp.ne.s32.totalorder %s33, %s36
    %p42 = scmp.eq.s32.totalorder %s9, 0
    %p43 = por %p41, %p42
    %p44 = scmp.ne.s32.totalorder %s33, %s36
    %p45 = scmp.eq.s32.totalorder %s14, 1
    %p46 = por %p44, %p45
    %p47 = scmp.ne.s32.totalorder %s36, %s37
    %p48 = scmp.eq.s32.totalorder %s14, 0
    %p49 = por %p47, %p48
    %p50 = scmp.ne.s32.totalorder %s36, %s37
    %p51 = scmp.eq.s32.totalorder %s15, 1
    %p52 = por %p50, %p51
    %p54 = scmp.ne.s32.totalorder %s37, %s53
    %p55 = scmp.eq.s32.totalorder %s15, 0
    %p56 = por %p54, %p55
    %s58 = sadd.s32 %s57, 1
    %p61 = scmp.eq.s32.totalorder %s9, 1
    %p62 = scmp.ne.s32.totalorder %s57, %s59
    %p63 = scmp.eq.s32.totalorder %s9, 0
    %p64 = por %p62, %p63
    %p65 = scmp.ne.s32.totalorder %s57, %s59
    %p66 = scmp.eq.s32.totalorder %s14, 1
    %p67 = por %p65, %p66
    %p68 = scmp.ne.s32.totalorder %s59, %s60
    %p69 = scmp.eq.s32.totalorder %s14, 0
    %p70 = por %p68, %p69
    %p71 = scmp.ne.s32.totalorder %s59, %s60
    %p72 = scmp.eq.s32.totalorder %s15, 1
    %p73 = por %p71, %p72
    %p75 = scmp.ne.s32.totalorder %s60, %s74
    %p76 = scmp.eq.s32.totalorder %s15, 0
    %p77 = por %p75, %p76
    %s79 = sadd.s32 %s78, 1
    %p82 = scmp.eq.s32.totalorder %s9, 1
    %p83 = scmp.ne.s32.totalorder %s78, %s80
    %p84 = scmp.eq.s32.totalorder %s9, 0
    %p85 = por %p83, %p84
    %p86 = scmp.ne.s32.totalorder %s78, %s80
    %p87 = scmp.eq.s32.totalorder %s14, 1
    %p88 = por %p86, %p87
    %p89 = scmp.ne.s32.totalorder %s80, %s81
    %p90 = scmp.eq.s32.totalorder %s14, 0
    %p91 = por %p89, %p90
    %p92 = scmp.ne.s32.totalorder %s80, %s81
    %p93 = scmp.eq.s32.totalorder %s15, 1
    %p94 = por %p92, %p93
    %p96 = scmp.ne.s32.totalorder %s81, %s95
    %p97 = scmp.eq.s32.totalorder %s15, 0
    %p98 = por %p96, %p97
    %s99 = ssub.s32 %s16, %s28
    %s100 = ssub.s32 %s17, %s24
    %s101 = sor.u32 %s99, %s100
    %p102 = scmp.eq.s32.totalorder %s101, 0
    %s104 = sadd.s32 %s103, 1
    %s105 = scalar_select %p102, %s103, %s104
    %p108 = pneg %p102
    %p109 = scmp.eq.s32.totalorder %s9, 1
    %p110 = por %p108, %p109
    %p111 = scmp.ne.s32.totalorder %s103, %s106
    %p112 = scmp.eq.s32.totalorder %s9, 0
    %p113 = por %p111, %p112
    %p114 = scmp.ne.s32.totalorder %s103, %s106
    %p115 = scmp.eq.s32.totalorder %s14, 1
    %p116 = por %p114, %p115
    %p117 = scmp.ne.s32.totalorder %s106, %s107
    %p118 = scmp.eq.s32.totalorder %s14, 0
    %p119 = por %p117, %p118
    %p120 = scmp.ne.s32.totalorder %s106, %s107
    %p121 = scmp.eq.s32.totalorder %s15, 1
    %p122 = por %p120, %p121
    %p124 = scmp.ne.s32.totalorder %s107, %s123
    %p125 = scmp.eq.s32.totalorder %s15, 0
    %p126 = por %p124, %p125
    %p127 = scmp.le.s32.totalorder 1, %s9
    %p128 = scmp.lt.s32.totalorder %s9, 3
    %p129 = pnand %p127, %p128
    %p130 = pneg %p129
    // Predicated region
    $region9: #{_forward_first.1} parent=5 // pred_check
      _
    $region10: #{_forward_first.1} parent=5 // pred_check_branch
      %132 = sbr.rel (%p129) target = $region12
    $region11: #{_forward_first.1} parent=5 // pred_region
      %s133 = ssub.s32 %s9, 1
      // Predicated region
      $region13: #{_forward_first.1} parent=11 // pred_check
        %p134 = pneg %p70
      $region14: #{_forward_first.1} parent=11 // pred_check_branch
        %136 = sbr.rel (%p134) target = $region16
      $region15: #{_forward_first.1} parent=11 // pred_region
        _
      $region16: #{_forward_first.1} parent=11 // pred_fallthru
        _
      // Predicated region
      $region17: #{_forward_first.1} parent=11 // pred_check
        %p137 = pneg %p91
      $region18: #{_forward_first.1} parent=11 // pred_check_branch
        %139 = sbr.rel (%p137) target = $region20
      $region19: #{_forward_first.1} parent=11 // pred_region
        _
      $region20: #{_forward_first.1} parent=11 // pred_fallthru
        _
    $region12: #{_forward_first.1} parent=5 // pred_fallthru
      _
    %p140 = scmp.lt.s32.totalorder %s9, 2
    // Predicated region
    $region21: #{_forward_first.1} parent=5 // pred_check
      %p141 = pneg %p140
    $region22: #{_forward_first.1} parent=5 // pred_check_branch
      %143 = sbr.rel (%p141) target = $region24
    $region23: #{_forward_first.1} parent=5 // pred_region
      // Predicated region
      $region25: #{_forward_first.1} parent=23 // pred_check
        %p144 = pneg %p43
      $region26: #{_forward_first.1} parent=23 // pred_check_branch
        %146 = sbr.rel (%p144) target = $region28
      $region27: #{_forward_first.1} parent=23 // pred_region
        %s147 = smul.u32 2, %s17
        %p148 = scmp.lt.s32.totalorder %s16, 1
        %s149 = scalar_select %p148, %s16, 1
        %p150 = scmp.lt.s32.totalorder %s147, 1
        %s151 = scalar_select %p150, %s147, 1
        %s152 = smul.addr %s149, 10
        %s153 = sadd.s32 %s151, %s152
        %s154 = smul.addr %s153, 4
        %s155 = scalar_lea.vmem %s0, %s154
        %s156 = smul.u32 2, %s17
      $region28: #{_forward_first.1} parent=23 // pred_fallthru
        _
    $region24: #{_forward_first.1} parent=5 // pred_fallthru
      _
    %p157 = scmp.le.s32.totalorder 1, %s9
    %p158 = scmp.lt.s32.totalorder %s9, 3
    %p159 = pnand %p157, %p158
    %p160 = pneg %p159
    // Predicated region
    $region29: #{_forward_first.1} parent=5 // pred_check
      _
    $region30: #{_forward_first.1} parent=5 // pred_check_branch
      %162 = sbr.rel (%p159) target = $region32
    $region31: #{_forward_first.1} parent=5 // pred_region
      %s163 = ssub.s32 %s9, 1
      %s164 = smul.u32 2, %s19
      %p165 = scmp.lt.s32.totalorder %s18, 1
      %s166 = scalar_select %p165, %s18, 1
      %p167 = scmp.lt.s32.totalorder %s164, 1
      %s168 = scalar_select %p167, %s164, 1
      %s169 = smul.addr %s166, 10
      %s170 = sadd.s32 %s168, %s169
      %s171 = smul.addr %s170, 4
      %s172 = scalar_lea.vmem %s0, %s171
      %p173 = pneg %p49
      %p174 = pneg %p46
      %p175 = pneg %p70
      %p176 = pneg %p67
      %p177 = pneg %p91
      %p178 = pneg %p88
      %p179 = pneg %p119
      %p180 = pneg %p116
      %s181 = smul.u32 2, %s19
      %p182 = scmp.lt.s32.totalorder %s18, 1
      %s183 = scalar_select %p182, %s18, 1
      %p184 = scmp.lt.s32.totalorder %s181, 1
      %s185 = scalar_select %p184, %s181, 1
      %s186 = smul.addr %s183, 2
      %s187 = sadd.s32 %s185, %s186
      %s188 = smul.addr %s187, 8
      %s189 = scalar_lea.vmem %s3, %s188
      %s190 = smul.u32 2, %s19
      %p191 = scmp.lt.s32.totalorder %s18, 1
      %s192 = scalar_select %p191, %s18, 1
      %p193 = scmp.lt.s32.totalorder %s190, 1
      %s194 = scalar_select %p193, %s190, 1
      %s195 = smul.addr %s192, 10
      %s196 = sadd.s32 %s194, %s195
      %s197 = smul.addr %s196, 4
      %s198 = scalar_lea.vmem %s0, %s197
      %s199 = smul.u32 2, %s19
      %s200 = smul.u32 2, %s19
      %p201 = scmp.lt.s32.totalorder %s18, 1
      %s202 = scalar_select %p201, %s18, 1
      %p203 = scmp.lt.s32.totalorder %s200, 1
      %s204 = scalar_select %p203, %s200, 1
      %s205 = smul.addr %s202, 2
      %s206 = sadd.s32 %s204, %s205
      %s207 = smul.addr %s206, 8
      %s208 = scalar_lea.vmem %s3, %s207
      %s209 = smul.u32 2, %s19
      %v211 = vld [vmem:[%s1] sm:$0xf]
      %v212 = vld [vmem:[%s198] sm:$0xff]
      %v213 = vld [vmem:[%s198 + $0x8] sm:$0xff]
      %v214 = vld [vmem:[%s198 + $0x10] sm:$0xff]
      %v215 = vld [vmem:[%s198 + $0x18] sm:$0xff]
      %v216 = vld [vmem:[%s198 + $0x20] sm:$0x33]
      %v217 = vld [vmem:[%s2] sm:$0xff]
      %219 = vset.pattern.permute.xlu0 0
      %220 = vperm.xlu0 %219, %v217
      %v221 = vpop.permute.xlu0 %220
      %v228 = vunpack.c.l.b16 %v212
      %v229 = vunpack.c.h.b16 %v212
      %v230 = vunpack.c.l.b16 %v213
      %v231 = vunpack.c.h.b16 %v213
      %v232 = vunpack.c.l.b16 %v214
      %v233 = vunpack.c.h.b16 %v214
      %v234 = vunpack.c.l.b16 %v215
      %v235 = vunpack.c.h.b16 %v215
      %v236 = vunpack.c.l.b16 %v216
      %v237 = vunpack.c.h.b16 %v216
      %v238 = vpack.c.b16 %v230, %v228
      %v239 = vpack.c.b16 %v231, %v229
      %v240 = vpack.c.b16 %v234, %v232
      %v241 = vpack.c.b16 %v235, %v233
      %v242 = vpack.c.b16 %v236, %v236
      %v243 = vpack.c.b16 %v237, %v237
      %vm248 = vcmask 293888
      %v250 = vsel %vm248, %v211, 0
      %vm252 = vcmask 1041408
      %v254 = vsel %vm252, %v242, 0
      %v257 = vsel %vm252, %v243, 0
      %259 = vmatprep.subr.bf16.mxu0 0
      %260 = vmatpush1.bf16.msra.mxu0 0
      %261 = vmatprep.subr.bf16.mxu0 0
      %262 = vmatpush1.bf16.msra.mxu0 0
      %263 = vmatprep.subr.bf16.mxu0 0
      %264 = vmatpush1.bf16.msra.mxu0 0
      %265 = vmatprep.subr.bf16.mxu0 0
      %266 = vmatpush1.bf16.msra.mxu0 0
      %267 = vmatprep.subr.bf16.mxu0 0
      %268 = vmatpush1.bf16.msra.mxu0 0
      %269 = vmatprep.subr.bf16.mxu0 %v257
      %270 = vmatpush1.bf16.msra.mxu0 %v254
      %271 = vmatprep.subr.bf16.mxu0 %v241
      %272 = vmatpush1.bf16.msra.mxu0 %v240
      %273 = vmatprep.subr.bf16.mxu0 %v239
      %274 = vmatpush1.bf16.msra.mxu0 %v238
      %275 = vmatprep.subr.bf16.mxu0 0
      %276 = vmatpush2.bf16.msra.mxu0 0
      %277 = vmatprep.subr.bf16.mxu0 0
      %278 = vmatpush2.bf16.msra.mxu0 0
      %279 = vmatprep.subr.bf16.mxu0 0
      %280 = vmatpush2.bf16.msra.mxu0 0
      %281 = vmatprep.subr.bf16.mxu0 0
      %282 = vmatpush2.bf16.msra.mxu0 0
      %283 = vmatprep.subr.bf16.mxu0 0
      %284 = vmatpush2.bf16.msra.mxu0 0
      %285 = vmatprep.subr.bf16.mxu0 0
      %286 = vmatpush2.bf16.msra.mxu0 0
      %287 = vmatprep.subr.bf16.mxu0 0
      %288 = vmatpush2.bf16.msra.mxu0 0
      %289 = vmatprep.subr.bf16.mxu0 0
      %290 = vmatpush2.bf16.msra.mxu0 0
      %291 = vmatprep.mubr.bf16.mxu0 0
      %292 = vmatmul.mubr.bf16.gmra.mxu0 %v250
      %v293 = vpop.f32.mrf.mxu0
      %v294 = vadd.f32 %v221, %v293
      %v295 = vpop.f32.mrf.mxu0
      %v296 = vadd.f32 %v221, %v295
      %v297 = vpop.f32.mrf.mxu0
      %v298 = vpop.f32.mrf.mxu0
      %299 = vdwg.mxu0
      %v300 = vtanh.pop %v294
      %v301 = vtanh.pop %v296
      %v302 = vmul.f32 %v300, 0.2
      %v303 = vmul.f32 %v301, 0.2
      %v304 = vmax.f32 %v300, %v302
      %v305 = vmax.f32 %v301, %v303
      %306 = vst [vmem:[%s208] sm:$0xff] %v304
      %307 = vst [vmem:[%s208 + $0x8] sm:$0xff] %v305
      %s308 = smul.u32 2, %s19
      %p309 = scmp.lt.s32.totalorder %s18, 1
      %s310 = scalar_select %p309, %s18, 1
      %p311 = scmp.lt.s32.totalorder %s308, 1
      %s312 = scalar_select %p311, %s308, 1
      %s313 = smul.addr %s310, 2
      %s314 = sadd.s32 %s312, %s313
      %s315 = smul.addr %s314, 8
      %s316 = scalar_lea.vmem %s3, %s315
      // Predicated region
      $region33: #{_forward_first.1} parent=31 // pred_check
        %p317 = pneg %p116
      $region34: #{_forward_first.1} parent=31 // pred_check_branch
        %319 = sbr.rel (%p317) target = $region36
      $region35: #{_forward_first.1} parent=31 // pred_region
        %s320 = smul.u32 2, %s19
      $region36: #{_forward_first.1} parent=31 // pred_fallthru
        _
    $region32: #{_forward_first.1} parent=5 // pred_fallthru
      _
    %p321 = scmp.le.s32.totalorder 2, %s9
    // Predicated region
    $region37: #{_forward_first.1} parent=5 // pred_check
      %p322 = pneg %p321
    $region38: #{_forward_first.1} parent=5 // pred_check_branch
      %324 = sbr.rel (%p322) target = $region40
    $region39: #{_forward_first.1} parent=5 // pred_region
      %s325 = ssub.s32 %s9, 2
      // Predicated region
      $region41: #{_forward_first.1} parent=39 // pred_check
        %p326 = pneg %p122
      $region42: #{_forward_first.1} parent=39 // pred_check_branch
        %328 = sbr.rel (%p326) target = $region44
      $region43: #{_forward_first.1} parent=39 // pred_region
        %s329 = smul.u32 2, %s21
        %p330 = scmp.lt.s32.totalorder %s20, 1
        %s331 = scalar_select %p330, %s20, 1
        %p332 = scmp.lt.s32.totalorder %s329, 1
        %s333 = scalar_select %p332, %s329, 1
        %s334 = smul.addr %s331, 2
        %s335 = sadd.s32 %s333, %s334
        %s336 = smul.addr %s335, 8
        %s337 = scalar_lea.vmem %s3, %s336
      $region44: #{_forward_first.1} parent=39 // pred_fallthru
        _
    $region40: #{_forward_first.1} parent=5 // pred_fallthru
      _
  $region6: #{_forward_first.1} parent=0 // loop_footer
    %s13 = sadd.s32 1, %s9
  $region7: #{_forward_first.1} parent=0 // loop_footer_branch
    %8 = sbr.rel target = $region3
  $region8: #{_forward_first.1} parent=0 // loop_exit
    _

</llo_original>
